<compile_context>
chip_gen: v7x
topology: tpu7x:2x2x1
jax: 0.10.0
libtpu: 0.0.40
codegen_flags: <defaults>
</compile_context>

<pallas_src>
import functools
import math

import jax
import jax.numpy as jnp
from jax import lax
from jax.experimental import pallas as pl
from jax.experimental.pallas import tpu as pltpu


def _conv_pool_kernel(p_ref, w_ref, b_ref, o_ref):
    """Fused conv + bias + ReLU + 2x2 max-pool over F frames.

    p_ref: (4, KKC, F*Ho*Wo)  pool-quadrant-major im2col columns
    w_ref: (Cout, KKC)        folded conv weights
    b_ref: (Cout, 1)          bias
    o_ref: (Cout, F*Ho*Wo)    pooled output (lane-dense last dim)
    """
    w = w_ref[...]
    # One MXU matmul per pool quadrant; elementwise max over quadrants == 2x2 max-pool.
    m = jnp.dot(w, p_ref[0], preferred_element_type=jnp.float32)
    for q in range(1, 4):
        m = jnp.maximum(m, jnp.dot(w, p_ref[q], preferred_element_type=jnp.float32))
    # Bias + ReLU applied once (they commute with the max above).
    o_ref[...] = jnp.maximum(m + b_ref[...], 0.0).astype(o_ref.dtype)


@functools.partial(jax.jit, static_argnames=("kernel_size", "padding", "frames_per_block"))
def conv3d_block_forward(x, weight, bias, *, kernel_size=3, padding=1, frames_per_block=None):
    """Forward pass of Conv3D_Block (spatial stride=1, norm_type=None).

    x      : (B, Cin, T, H, W)            float32  (PyTorch NCDHW)
    weight : (Cout, Cin, 1, K, K)         float32  (PyTorch Conv3d layout)
    bias   : (Cout,)                      float32
    returns: (B, Cout, T+2, Ho, Wo)       float32   (Ho = (H+2P-K+1)//2, etc.)
    """
    B, Cin, T, H, W = x.shape
    Cout = weight.shape[0]
    K = kernel_size
    P = padding
    Hc = H + 2 * P - K + 1                 # conv output spatial size
    Wc = W + 2 * P - K + 1
    Ho, Wo = Hc // 2, Wc // 2              # MaxPool3d drops a trailing odd row/col
    HoWo = Ho * Wo
    KKC = K * K * Cin
    N = B * T                              # real (non-time-pad) frames

    # ---- choose F = frames per grid step ----
    gran = 128 // math.gcd(HoWo, 128)      # smallest F with F*HoWo % 128 == 0 (lane-dense)
    if frames_per_block is None:
        bytes_per_frame = (4 * KKC + Cout) * HoWo * 4 * 2   # double-buffered in+out, f32
        vmem_cap = max(1, (8 << 20) // max(bytes_per_frame, 1))  # conservative, v7x-safe
        target = max(1, min(vmem_cap, (N + 1) // 2))        # keep >= 2 grid steps (2 TCs on v7x)
    else:
        target = frames_per_block
    F = max(gran, (target // gran) * gran)
    Npad = ((N + F - 1) // F) * F
    n_blocks = Npad // F
    Fcols = F * HoWo

    # ---- wrapper glue: NCDHW -> frames, spatial halo pad, quadrant-major im2col ----
    xf = jnp.transpose(x, (0, 2, 3, 4, 1)).reshape(N, H, W, Cin)          # (N, H, W, Cin)
    xp = jnp.pad(xf, ((0, Npad - N), (P, P), (P, P), (0, 0)))
    cols = [xp[:, kh:kh + Hc, kw:kw + Wc, :] for kh in range(K) for kw in range(K)]
    col = jnp.stack(cols, axis=3)                                         # (Npad, Hc, Wc, K*K, Cin)
    col = col[:, :2 * Ho, :2 * Wo]                                        # match MaxPool trunc.
    col = col.reshape(Npad, Ho, 2, Wo, 2, KKC)                            # h=2ho+ph, w=2wo+pw
    patches = jnp.transpose(col, (2, 4, 5, 0, 1, 3)).reshape(4, KKC, Npad * HoWo)
    # NOTE: on v6e/v7x, casting patches/w_mat to bf16 here (keeping f32 accumulation in the
    # kernel) halves DMA traffic; kept f32 for bit-tight comparison with the f32 reference.

    w_mat = jnp.transpose(weight[:, :, 0, :, :], (0, 2, 3, 1)).reshape(Cout, KKC)
    b_col = bias.reshape(Cout, 1)

    out = pl.pallas_call(
        _conv_pool_kernel,
        out_shape=jax.ShapeDtypeStruct((Cout, Npad * HoWo), jnp.float32),
        grid=(n_blocks,),
        in_specs=[
            pl.BlockSpec((4, KKC, Fcols), lambda i: (0, 0, i)),
            pl.BlockSpec((Cout, KKC), lambda i: (0, 0)),
            pl.BlockSpec((Cout, 1), lambda i: (0, 0)),
        ],
        out_specs=pl.BlockSpec((Cout, Fcols), lambda i: (0, i)),
        compiler_params=pltpu.CompilerParams(
            dimension_semantics=("parallel",),
        ),
    )(patches, w_mat, b_col)

    # ---- unflatten: (Cout, Npad*Ho*Wo) -> (B, Cout, T, Ho, Wo) ----
    out = out.reshape(Cout, Npad, Ho, Wo)[:, :N]
    out = out.reshape(Cout, B, T, Ho, Wo)
    out = jnp.transpose(out, (1, 0, 2, 3, 4))

    # Temporal padding of 1 with a size-1 temporal kernel: edge frames are relu(bias)
    # (conv(zeros)+bias -> ReLU -> pool of a constant). Computed here, not in the kernel.
    edge = jnp.broadcast_to(jnp.maximum(bias, 0.0)[None, :, None, None, None],
                            (B, Cout, 1, Ho, Wo)).astype(out.dtype)
    return jnp.concatenate([edge, out, edge], axis=2)        # (B, Cout, T+2, Ho, Wo)


def _reference_forward(x, weight, bias):
    """Pure-JAX reference mirroring the PyTorch module (conv3d -> relu -> maxpool)."""
    y = lax.conv_general_dilated(
        x, weight,
        window_strides=(1, 1, 1),
        padding=[(1, 1), (1, 1), (1, 1)],
        dimension_numbers=("NCDHW", "OIDHW", "NCDHW"),
    )
    y = y + bias[None, :, None, None, None]
    y = jnp.maximum(y, 0.0)
    y = lax.reduce_window(
        y, -jnp.inf, lax.max,
        window_dimensions=(1, 1, 1, 2, 2),
        window_strides=(1, 1, 1, 2, 2),
        padding="VALID",
    )
    return y


if __name__ == "__main__":
    # Small shapes consistent with the module's BxCxTxHxW input convention.
    B, Cin, Cout, T, H, W = 2, 4, 8, 4, 16, 16
    K = 3

    key = jax.random.PRNGKey(0)
    kx, kw, kb = jax.random.split(key, 3)
    x = jax.random.normal(kx, (B, Cin, T, H, W), dtype=jnp.float32)
    # Deterministic parameter init (Conv3d weight shape: (Cout, Cin, 1, K, K)).
    fan_in = Cin * 1 * K * K
    bound = 1.0 / (fan_in ** 0.5)
    weight = jax.random.uniform(kw, (Cout, Cin, 1, K, K), jnp.float32, -bound, bound)
    bias = jax.random.uniform(kb, (Cout,), jnp.float32, -bound, bound)

    out = jax.block_until_ready(conv3d_block_forward(x, weight, bias))
    ref = jax.block_until_ready(_reference_forward(x, weight, bias))

    assert out.shape == (B, Cout, T + 2, H // 2, W // 2), out.shape
    max_err = float(jnp.max(jnp.abs(out - ref)))
    assert max_err < 2e-3, max_err
    print("KERNEL_OK")
</pallas_src>

<mosaic_0001>
module attributes {stable_mosaic.version = 11 : i64} {
  func.func @_conv_pool_kernel(%arg0: i32, %arg1: memref<4x36x256xf32, #tpu.memory_space<vmem>>, %arg2: memref<8x36xf32, #tpu.memory_space<vmem>>, %arg3: memref<8x1xf32, #tpu.memory_space<vmem>>, %arg4: memref<8x256xf32, #tpu.memory_space<vmem>>) attributes {dimension_semantics = [#tpu.dimension_semantics<parallel>], iteration_bounds = array<i64: 2>, scalar_prefetch = 0 : i64, scratch_operands = 0 : i64, tpu.core_type = #tpu.core_type<tc>, window_params = [{transform_indices = @transform_0, window_bounds = array<i64: 4, 36, 256>}, {pipeline_mode = #tpu.pipeline_mode<synchronous>, transform_indices = @transform_1, window_bounds = array<i64: 8, 36>}, {pipeline_mode = #tpu.pipeline_mode<synchronous>, transform_indices = @transform_2, window_bounds = array<i64: 8, 1>}, {transform_indices = @transform_3, window_bounds = array<i64: 8, 256>}]} {
    %c0 = arith.constant 0 : index
    %c0_0 = arith.constant 0 : index
    %0 = vector.load %arg2[%c0, %c0_0] : memref<8x36xf32, #tpu.memory_space<vmem>>, vector<8x36xf32>
    %c0_1 = arith.constant 0 : index
    %c0_2 = arith.constant 0 : index
    %c0_3 = arith.constant 0 : index
    %1 = vector.load %arg1[%c0_1, %c0_2, %c0_3] : memref<4x36x256xf32, #tpu.memory_space<vmem>>, vector<1x36x256xf32>
    %2 = vector.shape_cast %1 : vector<1x36x256xf32> to vector<36x256xf32>
    %cst = arith.constant dense<0.000000e+00> : vector<8x256xf32>
    %3 = tpu.matmul %0, %2, %cst {dimension_numbers = #tpu.dot_dimension_numbers<[1], [0], [0], [1], [0, 0, 1, 1], [], []>} : vector<8x36xf32>, vector<36x256xf32>, vector<8x256xf32> -> vector<8x256xf32>
    %c1 = arith.constant 1 : index
    %c0_4 = arith.constant 0 : index
    %c0_5 = arith.constant 0 : index
    %4 = vector.load %arg1[%c1, %c0_4, %c0_5] : memref<4x36x256xf32, #tpu.memory_space<vmem>>, vector<1x36x256xf32>
    %5 = vector.shape_cast %4 : vector<1x36x256xf32> to vector<36x256xf32>
    %cst_6 = arith.constant dense<0.000000e+00> : vector<8x256xf32>
    %6 = tpu.matmul %0, %5, %cst_6 {dimension_numbers = #tpu.dot_dimension_numbers<[1], [0], [0], [1], [0, 0, 1, 1], [], []>} : vector<8x36xf32>, vector<36x256xf32>, vector<8x256xf32> -> vector<8x256xf32>
    %7 = arith.maximumf %3, %6 : vector<8x256xf32>
    %c2 = arith.constant 2 : index
    %c0_7 = arith.constant 0 : index
    %c0_8 = arith.constant 0 : index
    %8 = vector.load %arg1[%c2, %c0_7, %c0_8] : memref<4x36x256xf32, #tpu.memory_space<vmem>>, vector<1x36x256xf32>
    %9 = vector.shape_cast %8 : vector<1x36x256xf32> to vector<36x256xf32>
    %cst_9 = arith.constant dense<0.000000e+00> : vector<8x256xf32>
    %10 = tpu.matmul %0, %9, %cst_9 {dimension_numbers = #tpu.dot_dimension_numbers<[1], [0], [0], [1], [0, 0, 1, 1], [], []>} : vector<8x36xf32>, vector<36x256xf32>, vector<8x256xf32> -> vector<8x256xf32>
    %11 = arith.maximumf %7, %10 : vector<8x256xf32>
    %c3 = arith.constant 3 : index
    %c0_10 = arith.constant 0 : index
    %c0_11 = arith.constant 0 : index
    %12 = vector.load %arg1[%c3, %c0_10, %c0_11] : memref<4x36x256xf32, #tpu.memory_space<vmem>>, vector<1x36x256xf32>
    %13 = vector.shape_cast %12 : vector<1x36x256xf32> to vector<36x256xf32>
    %cst_12 = arith.constant dense<0.000000e+00> : vector<8x256xf32>
    %14 = tpu.matmul %0, %13, %cst_12 {dimension_numbers = #tpu.dot_dimension_numbers<[1], [0], [0], [1], [0, 0, 1, 1], [], []>} : vector<8x36xf32>, vector<36x256xf32>, vector<8x256xf32> -> vector<8x256xf32>
    %15 = arith.maximumf %11, %14 : vector<8x256xf32>
    %c0_13 = arith.constant 0 : index
    %c0_14 = arith.constant 0 : index
    %16 = vector.load %arg3[%c0_13, %c0_14] : memref<8x1xf32, #tpu.memory_space<vmem>>, vector<8x1xf32>
    %17 = vector.broadcast %16 : vector<8x1xf32> to vector<8x256xf32>
    %18 = arith.addf %15, %17 : vector<8x256xf32>
    %cst_15 = arith.constant 0.000000e+00 : f32
    %19 = vector.broadcast %cst_15 : f32 to vector<8x256xf32>
    %20 = arith.maximumf %18, %19 : vector<8x256xf32>
    %c0_16 = arith.constant 0 : index
    %c0_17 = arith.constant 0 : index
    %21 = vector.load %arg4[%c0_16, %c0_17] : memref<8x256xf32, #tpu.memory_space<vmem>>, vector<8x256xf32>
    tpu.vector_store %arg4[%c0_16, %c0_17], %20 {strides = array<i32>} : memref<8x256xf32, #tpu.memory_space<vmem>>, vector<8x256xf32>,
    return
  }
  func.func @transform_0(%arg0: i32) -> (i32, i32, i32) {
    %c0_i32 = arith.constant 0 : i32
    %c0_i32_0 = arith.constant 0 : i32
    %c0_i32_1 = arith.constant 0 : i32
    return %c0_i32, %c0_i32_0, %arg0 : i32, i32, i32
  }
  func.func @transform_1(%arg0: i32) -> (i32, i32) {
    %c0_i32 = arith.constant 0 : i32
    %c0_i32_0 = arith.constant 0 : i32
    %c0_i32_1 = arith.constant 0 : i32
    return %c0_i32, %c0_i32_0 : i32, i32
  }
  func.func @transform_2(%arg0: i32) -> (i32, i32) {
    %c0_i32 = arith.constant 0 : i32
    %c0_i32_0 = arith.constant 0 : i32
    %c0_i32_1 = arith.constant 0 : i32
    return %c0_i32, %c0_i32_0 : i32, i32
  }
  func.func @transform_3(%arg0: i32) -> (i32, i32) {
    %c0_i32 = arith.constant 0 : i32
    %c0_i32_0 = arith.constant 0 : i32
    return %c0_i32, %arg0 : i32, i32
  }
}

</mosaic_0001>

<llo_original>
// kernel: conv3d_block_forward.1
$region0: #{conv3d_block_forward.1}
  #allocation0 [shape = 'u32[]', space=smem, size = 0x4, offset = 0x4, fixed_abs, tag = 'smem constant byte address 0x4 - core index']
  #allocation1 [shape = 'u32[144,128]{1,0:T(1,128)}', space=vmem, size = 0x12000, scoped, tag = 'internal scratch']
  %s0 = inlined_call_operand.vmem [shape: f32[4,36,512], index: 0, kind: input, shape index: {}]
  %s1 = inlined_call_operand.vmem [shape: f32[8,36], index: 1, kind: input, shape index: {}]
  %s2 = inlined_call_operand.vmem [shape: f32[8,1], index: 2, kind: input, shape index: {}]
  %s3 = inlined_call_operand.vmem [shape: f32[8,512], index: 3, kind: output, shape index: {}]
  %s4 = sld [smem:[#allocation0]]
  $region68: #{conv3d_block_forward.1} parent=0
    _
  %s6 = ssub.s32 1, %s4
  %s7 = scalar_select 0, %s6, %s4
  $region1: #{conv3d_block_forward.1} parent=0
    #allocation2 [shape = 'u8[327680]{0}', space=vmem, size = 0x50000, scoped, tag = 'input window, operand 0']
    loop: start=0, step=1, limit=4
    $region2: #{conv3d_block_forward.1} parent=1 // loop_pre_header
      _
    $region3: #{conv3d_block_forward.1} parent=1 // loop_header
      %s9 = sphi 0, %s13
      %p10 = scmp.ge.s32.totalorder %s9, 4
      %s19 = sphi 0, %s21
      %s22 = sphi 0, %s19
      %s23 = sphi 0, %s22
      %s39 = sphi 0, %s23
      %s43 = sphi 0, %s43
      %s45 = sphi 0, %s43
      %s46 = sphi 0, %s45
      %s60 = sphi 0, %s46
      %s64 = sphi 0, %s64
      %s66 = sphi 0, %s64
      %s67 = sphi 0, %s66
      %s81 = sphi 0, %s67
      %s87 = sphi 0, %s89
      %s90 = sphi 0, %s87
      %s91 = sphi 0, %s90
      %s107 = sphi 0, %s91
    $region4: #{conv3d_block_forward.1} parent=1 // loop_header_branch
      %12 = sbr.rel (%p10) target = $region8
    $region5: #{conv3d_block_forward.1} parent=1 // loop_body
      %s14 = ssub.s32 %s9, 1
      %s15 = ssub.s32 %s9, 2
      %s16 = sadd.s32 %s9, 1
      %s17 = ssub.s32 %s9, %s16
      %p18 = scmp.eq.s32.totalorder %s17, 0
      %s20 = sadd.s32 %s19, 1
      %s21 = scalar_select %p18, %s19, %s20
      %p24 = pneg %p18
      %p25 = scmp.eq.s32.totalorder %s9, 1
      %p26 = por %p24, %p25
      %p27 = scmp.ne.s32.totalorder %s19, %s22
      %p28 = scmp.eq.s32.totalorder %s9, 0
      %p29 = por %p27, %p28
      %p30 = scmp.ne.s32.totalorder %s19, %s22
      %p31 = scmp.eq.s32.totalorder %s14, 1
      %p32 = por %p30, %p31
      %p33 = scmp.ne.s32.totalorder %s22, %s23
      %p34 = scmp.eq.s32.totalorder %s14, 0
      %p35 = por %p33, %p34
      %p36 = scmp.ne.s32.totalorder %s22, %s23
      %p37 = scmp.eq.s32.totalorder %s15, 1
      %p38 = por %p36, %p37
      %p40 = scmp.ne.s32.totalorder %s23, %s39
      %p41 = scmp.eq.s32.totalorder %s15, 0
      %p42 = por %p40, %p41
      %s44 = sadd.s32 %s43, 1
      %p47 = scmp.eq.s32.totalorder %s9, 1
      %p48 = scmp.ne.s32.totalorder %s43, %s45
      %p49 = scmp.eq.s32.totalorder %s9, 0
      %p50 = por %p48, %p49
      %p51 = scmp.ne.s32.totalorder %s43, %s45
      %p52 = scmp.eq.s32.totalorder %s14, 1
      %p53 = por %p51, %p52
      %p54 = scmp.ne.s32.totalorder %s45, %s46
      %p55 = scmp.eq.s32.totalorder %s14, 0
      %p56 = por %p54, %p55
      %p57 = scmp.ne.s32.totalorder %s45, %s46
      %p58 = scmp.eq.s32.totalorder %s15, 1
      %p59 = por %p57, %p58
      %p61 = scmp.ne.s32.totalorder %s46, %s60
      %p62 = scmp.eq.s32.totalorder %s15, 0
      %p63 = por %p61, %p62
      %s65 = sadd.s32 %s64, 1
      %p68 = scmp.eq.s32.totalorder %s9, 1
      %p69 = scmp.ne.s32.totalorder %s64, %s66
      %p70 = scmp.eq.s32.totalorder %s9, 0
      %p71 = por %p69, %p70
      %p72 = scmp.ne.s32.totalorder %s64, %s66
      %p73 = scmp.eq.s32.totalorder %s14, 1
      %p74 = por %p72, %p73
      %p75 = scmp.ne.s32.totalorder %s66, %s67
      %p76 = scmp.eq.s32.totalorder %s14, 0
      %p77 = por %p75, %p76
      %p78 = scmp.ne.s32.totalorder %s66, %s67
      %p79 = scmp.eq.s32.totalorder %s15, 1
      %p80 = por %p78, %p79
      %p82 = scmp.ne.s32.totalorder %s67, %s81
      %p83 = scmp.eq.s32.totalorder %s15, 0
      %p84 = por %p82, %p83
      %s85 = ssub.s32 %s9, %s16
      %p86 = scmp.eq.s32.totalorder %s85, 0
      %s88 = sadd.s32 %s87, 1
      %s89 = scalar_select %p86, %s87, %s88
      %p92 = pneg %p86
      %p93 = scmp.eq.s32.totalorder %s9, 1
      %p94 = por %p92, %p93
      %p95 = scmp.ne.s32.totalorder %s87, %s90
      %p96 = scmp.eq.s32.totalorder %s9, 0
      %p97 = por %p95, %p96
      %p98 = scmp.ne.s32.totalorder %s87, %s90
      %p99 = scmp.eq.s32.totalorder %s14, 1
      %p100 = por %p98, %p99
      %p101 = scmp.ne.s32.totalorder %s90, %s91
      %p102 = scmp.eq.s32.totalorder %s14, 0
      %p103 = por %p101, %p102
      %p104 = scmp.ne.s32.totalorder %s90, %s91
      %p105 = scmp.eq.s32.totalorder %s15, 1
      %p106 = por %p104, %p105
      %p108 = scmp.ne.s32.totalorder %s91, %s107
      %p109 = scmp.eq.s32.totalorder %s15, 0
      %p110 = por %p108, %p109
      %p111 = scmp.le.s32.totalorder 1, %s9
      %p112 = scmp.lt.s32.totalorder %s9, 3
      %p113 = pnand %p111, %p112
      %p114 = pneg %p113
      // Predicated region
      $region9: #{conv3d_block_forward.1} parent=5 // pred_check
        _
      $region10: #{conv3d_block_forward.1} parent=5 // pred_check_branch
        %116 = sbr.rel (%p113) target = $region12
      $region11: #{conv3d_block_forward.1} parent=5 // pred_region
        %s117 = ssub.s32 %s9, 1
        // Predicated region
        $region13: #{conv3d_block_forward.1} parent=11 // pred_check
          %p118 = pneg %p56
        $region14: #{conv3d_block_forward.1} parent=11 // pred_check_branch
          %120 = sbr.rel (%p118) target = $region16
        $region15: #{conv3d_block_forward.1} parent=11 // pred_region
          _
        $region16: #{conv3d_block_forward.1} parent=11 // pred_fallthru
          _
        // Predicated region
        $region17: #{conv3d_block_forward.1} parent=11 // pred_check
          %p121 = pneg %p77
        $region18: #{conv3d_block_forward.1} parent=11 // pred_check_branch
          %123 = sbr.rel (%p121) target = $region20
        $region19: #{conv3d_block_forward.1} parent=11 // pred_region
          _
        $region20: #{conv3d_block_forward.1} parent=11 // pred_fallthru
          _
      $region12: #{conv3d_block_forward.1} parent=5 // pred_fallthru
        _
      %p124 = scmp.lt.s32.totalorder %s9, 2
      // Predicated region
      $region21: #{conv3d_block_forward.1} parent=5 // pred_check
        %p125 = pneg %p124
      $region22: #{conv3d_block_forward.1} parent=5 // pred_check_branch
        %127 = sbr.rel (%p125) target = $region24
      $region23: #{conv3d_block_forward.1} parent=5 // pred_region
        // Predicated region
        $region25: #{conv3d_block_forward.1} parent=23 // pred_check
          %p128 = pneg %p29
        $region26: #{conv3d_block_forward.1} parent=23 // pred_check_branch
          %130 = sbr.rel (%p128) target = $region28
        $region27: #{conv3d_block_forward.1} parent=23 // pred_region
          %s131 = sand.u32 %s19, 1
          %s132 = sand.u32 %s19, 1
          %s133 = smul.addr %s132, 320
          %s134 = scalar_lea.vmem [#allocation2], %s133
          %s135 = smul.u32 2, %s9
          %s136 = smul.addr %s135, 8
          %s137 = scalar_lea.vmem %s0, %s136
          // Predicated region
          $region29: #{conv3d_block_forward.1} parent=27 // pred_check
            _
          $region30: #{conv3d_block_forward.1} parent=27 // pred_check_branch
            %139 = sbr.rel (0) target = $region32
          $region31: #{conv3d_block_forward.1} parent=27 // pred_region
            // Predicated region
            $region33: #{conv3d_block_forward.1} parent=31 // pred_check
              _
            $region34: #{conv3d_block_forward.1} parent=31 // pred_check_branch
              %141 = sbr.rel (0) target = $region36
            $region35: #{conv3d_block_forward.1} parent=31 // pred_region
              loop: start=0, step=1, limit=1
              $region37: #{conv3d_block_forward.1} parent=35 // loop_pre_header
                _
              $region38: #{conv3d_block_forward.1} parent=35 // loop_header
                %s143 = sphi 0, %s147
                %p144 = scmp.ge.s32.totalorder %s143, 1
                %s148 = sphi %s137, %s137
                %s149 = sphi %s134, %s134
              $region39: #{conv3d_block_forward.1} parent=35 // loop_header_branch
                %146 = sbr.rel (%p144) target = $region43
              $region40: #{conv3d_block_forward.1} parent=35 // loop_body
                %v150 = vld [vmem:[%s148] sm:$0xff]
                %151 = vst [vmem:[%s149] sm:$0xff] %v150
                %v152 = vld [vmem:[%s148 + $0x8] sm:$0xff]
                %153 = vst [vmem:[%s149 + $0x8] sm:$0xff] %v152
                %v154 = vld [vmem:[%s148 + $0x20] sm:$0xff]
                %155 = vst [vmem:[%s149 + $0x10] sm:$0xff] %v154
                %v156 = vld [vmem:[%s148 + $0x28] sm:$0xff]
                %157 = vst [vmem:[%s149 + $0x18] sm:$0xff] %v156
                %v158 = vld [vmem:[%s148 + $0x40] sm:$0xff]
                %159 = vst [vmem:[%s149 + $0x20] sm:$0xff] %v158
                %v160 = vld [vmem:[%s148 + $0x48] sm:$0xff]
                %161 = vst [vmem:[%s149 + $0x28] sm:$0xff] %v160
                %v162 = vld [vmem:[%s148 + $0x60] sm:$0xff]
                %163 = vst [vmem:[%s149 + $0x30] sm:$0xff] %v162
                %v164 = vld [vmem:[%s148 + $0x68] sm:$0xff]
                %165 = vst [vmem:[%s149 + $0x38] sm:$0xff] %v164
                %v166 = vld [vmem:[%s148 + $0x80] sm:$0xff]
                %167 = vst [vmem:[%s149 + $0x40] sm:$0xff] %v166
                %v168 = vld [vmem:[%s148 + $0x88] sm:$0xff]
                %169 = vst [vmem:[%s149 + $0x48] sm:$0xff] %v168
                %v170 = vld [vmem:[%s148 + $0xa0] sm:$0xff]
                %171 = vst [vmem:[%s149 + $0x50] sm:$0xff] %v170
                %v172 = vld [vmem:[%s148 + $0xa8] sm:$0xff]
                %173 = vst [vmem:[%s149 + $0x58] sm:$0xff] %v172
                %v174 = vld [vmem:[%s148 + $0xc0] sm:$0xff]
                %175 = vst [vmem:[%s149 + $0x60] sm:$0xff] %v174
                %v176 = vld [vmem:[%s148 + $0xc8] sm:$0xff]
                %177 = vst [vmem:[%s149 + $0x68] sm:$0xff] %v176
                %v178 = vld [vmem:[%s148 + $0xe0] sm:$0xff]
                %179 = vst [vmem:[%s149 + $0x70] sm:$0xff] %v178
                %v180 = vld [vmem:[%s148 + $0xe8] sm:$0xff]
                %181 = vst [vmem:[%s149 + $0x78] sm:$0xff] %v180
                %v182 = vld [vmem:[%s148 + $0x100] sm:$0xff]
                %183 = vst [vmem:[%s149 + $0x80] sm:$0xff] %v182
                %v184 = vld [vmem:[%s148 + $0x108] sm:$0xff]
                %185 = vst [vmem:[%s149 + $0x88] sm:$0xff] %v184
                %v186 = vld [vmem:[%s148 + $0x120] sm:$0xff]
                %187 = vst [vmem:[%s149 + $0x90] sm:$0xff] %v186
                %v188 = vld [vmem:[%s148 + $0x128] sm:$0xff]
                %189 = vst [vmem:[%s149 + $0x98] sm:$0xff] %v188
                %v190 = vld [vmem:[%s148 + $0x140] sm:$0xff]
                %191 = vst [vmem:[%s149 + $0xa0] sm:$0xff] %v190
                %v192 = vld [vmem:[%s148 + $0x148] sm:$0xff]
                %193 = vst [vmem:[%s149 + $0xa8] sm:$0xff] %v192
                %v194 = vld [vmem:[%s148 + $0x160] sm:$0xff]
                %195 = vst [vmem:[%s149 + $0xb0] sm:$0xff] %v194
                %v196 = vld [vmem:[%s148 + $0x168] sm:$0xff]
                %197 = vst [vmem:[%s149 + $0xb8] sm:$0xff] %v196
                %v198 = vld [vmem:[%s148 + $0x180] sm:$0xff]
                %199 = vst [vmem:[%s149 + $0xc0] sm:$0xff] %v198
                %v200 = vld [vmem:[%s148 + $0x188] sm:$0xff]
                %201 = vst [vmem:[%s149 + $0xc8] sm:$0xff] %v200
                %v202 = vld [vmem:[%s148 + $0x1a0] sm:$0xff]
                %203 = vst [vmem:[%s149 + $0xd0] sm:$0xff] %v202
                %v204 = vld [vmem:[%s148 + $0x1a8] sm:$0xff]
                %205 = vst [vmem:[%s149 + $0xd8] sm:$0xff] %v204
                %v206 = vld [vmem:[%s148 + $0x1c0] sm:$0xff]
                %207 = vst [vmem:[%s149 + $0xe0] sm:$0xff] %v206
                %v208 = vld [vmem:[%s148 + $0x1c8] sm:$0xff]
                %209 = vst [vmem:[%s149 + $0xe8] sm:$0xff] %v208
                %v210 = vld [vmem:[%s148 + $0x1e0] sm:$0xff]
                %211 = vst [vmem:[%s149 + $0xf0] sm:$0xff] %v210
                %v212 = vld [vmem:[%s148 + $0x1e8] sm:$0xff]
                %213 = vst [vmem:[%s149 + $0xf8] sm:$0xff] %v212
                %v214 = vld [vmem:[%s148 + $0x200] sm:$0xff]
                %215 = vst [vmem:[%s149 + $0x100] sm:$0xff] %v214
                %v216 = vld [vmem:[%s148 + $0x208] sm:$0xff]
                %217 = vst [vmem:[%s149 + $0x108] sm:$0xff] %v216
                %v218 = vld [vmem:[%s148 + $0x220] sm:$0xff]
                %219 = vst [vmem:[%s149 + $0x110] sm:$0xff] %v218
                %v220 = vld [vmem:[%s148 + $0x228] sm:$0xff]
                %221 = vst [vmem:[%s149 + $0x118] sm:$0xff] %v220
                %v222 = vld [vmem:[%s148 + $0x240] sm:$0xff]
                %223 = vst [vmem:[%s149 + $0x120] sm:$0xff] %v222
                %v224 = vld [vmem:[%s148 + $0x248] sm:$0xff]
                %225 = vst [vmem:[%s149 + $0x128] sm:$0xff] %v224
                %v226 = vld [vmem:[%s148 + $0x260] sm:$0xff]
                %227 = vst [vmem:[%s149 + $0x130] sm:$0xff] %v226
                %v228 = vld [vmem:[%s148 + $0x268] sm:$0xff]
                %229 = vst [vmem:[%s149 + $0x138] sm:$0xff] %v228
              $region41: #{conv3d_block_forward.1} parent=35 // loop_footer
                %s147 = sadd.s32 1, %s143
              $region42: #{conv3d_block_forward.1} parent=35 // loop_footer_branch
                %142 = sbr.rel target = $region38
              $region43: #{conv3d_block_forward.1} parent=35 // loop_exit
                _
            $region36: #{conv3d_block_forward.1} parent=31 // pred_fallthru
              _
            // Predicated region
            $region44: #{conv3d_block_forward.1} parent=31 // pred_check
              _
            $region45: #{conv3d_block_forward.1} parent=31 // pred_check_branch
              %231 = sbr.rel target = $region47
            $region46: #{conv3d_block_forward.1} parent=31 // pred_region
              _
            $region47: #{conv3d_block_forward.1} parent=31 // pred_fallthru
              _
          $region32: #{conv3d_block_forward.1} parent=27 // pred_fallthru
            _
          %232 = vnop
        $region28: #{conv3d_block_forward.1} parent=23 // pred_fallthru
          _
      $region24: #{conv3d_block_forward.1} parent=5 // pred_fallthru
        _
      %p233 = scmp.le.s32.totalorder 1, %s9
      %p234 = scmp.lt.s32.totalorder %s9, 3
      %p235 = pnand %p233, %p234
      %p236 = pneg %p235
      // Predicated region
      $region48: #{conv3d_block_forward.1} parent=5 // pred_check
        _
      $region49: #{conv3d_block_forward.1} parent=5 // pred_check_branch
        %238 = sbr.rel (%p235) target = $region51
      $region50: #{conv3d_block_forward.1} parent=5 // pred_region
        %s239 = ssub.s32 %s9, 1
        %s240 = sand.u32 %s22, 1
        %s241 = sand.u32 %s22, 1
        %s242 = smul.addr %s241, 320
        %s243 = scalar_lea.vmem [#allocation2], %s242
        // Predicated region
        $region52: #{conv3d_block_forward.1} parent=50 // pred_check
          %p244 = pneg %p35
        $region53: #{conv3d_block_forward.1} parent=50 // pred_check_branch
          %246 = sbr.rel (%p244) target = $region55
        $region54: #{conv3d_block_forward.1} parent=50 // pred_region
          _
        $region55: #{conv3d_block_forward.1} parent=50 // pred_fallthru
          _
        %s247 = sand.u32 %s22, 1
        %s248 = sand.u32 %s22, 1
        %s249 = smul.addr %s248, 320
        %s250 = scalar_lea.vmem [#allocation2], %s249
        %p251 = pneg %p35
        %p252 = pneg %p32
        %p253 = pneg %p56
        %p254 = pneg %p53
        %p255 = pneg %p77
        %p256 = pneg %p74
        %p257 = pneg %p103
        %p258 = pneg %p100
        %s259 = smul.u32 2, %s14
        %p260 = scmp.lt.s32.totalorder %s259, 3
        %s261 = scalar_select %p260, %s259, 3
        %s262 = smul.addr %s261, 8
        %s263 = scalar_lea.vmem %s3, %s262
        %s264 = smul.u32 2, %s14
        %s265 = smul.u32 2, %s14
        %p266 = scmp.lt.s32.totalorder %s265, 3
        %s267 = scalar_select %p266, %s265, 3
        %s268 = smul.addr %s267, 8
        %s269 = scalar_lea.vmem %s3, %s268
        %s270 = smul.u32 2, %s14
        %v271 = vld [vmem:[%s1] sm:$0xff]
        %v272 = vld [vmem:[%s243] sm:$0xff]
        %v273 = vld [vmem:[%s243 + $0x8] sm:$0xff]
        %v274 = vld [vmem:[%s243 + $0x10] sm:$0xff]
        %v275 = vld [vmem:[%s243 + $0x18] sm:$0xff]
        %v276 = vld [vmem:[%s243 + $0x20] sm:$0xff]
        %v277 = vld [vmem:[%s243 + $0x28] sm:$0xff]
        %v278 = vld [vmem:[%s243 + $0x30] sm:$0xff]
        %v279 = vld [vmem:[%s243 + $0x38] sm:$0xff]
        %v280 = vld [vmem:[%s243 + $0x40] sm:$0xf]
        %v281 = vld [vmem:[%s243 + $0x48] sm:$0xf]
        %vm282 = vcmask 293888
        %v284 = vsel %vm282, %v271, 0
        %vm286 = vcmask 1043456
        %v288 = vsel %vm286, %v280, 0
        %v291 = vsel %vm286, %v281, 0
        %293 = vmatprep.subr.mxu0 %v273
        %294 = vmatpush1.msra.mxu0 %v272
        %295 = vmatprep.subr.mxu0 %v275
        %296 = vmatpush1.msra.mxu0 %v274
        %297 = vmatprep.subr.mxu0 %v277
        %298 = vmatpush1.msra.mxu0 %v276
        %299 = vmatprep.subr.mxu0 %v279
        %300 = vmatpush1.msra.mxu0 %v278
        %301 = vmatprep.subr.mxu0 %v291
        %302 = vmatpush1.msra.mxu0 %v288
        %303 = vmatprep.subr.mxu0 0.0
        %304 = vmatpush1.msra.mxu0 0.0
        %305 = vmatprep.subr.mxu0 0.0
        %306 = vmatpush1.msra.mxu0 0.0
        %307 = vmatprep.subr.mxu0 0.0
        %308 = vmatpush1.msra.mxu0 0.0
        %309 = vmatprep.subr.mxu0 0.0
        %310 = vmatpush1.msra.mxu0 0.0
        %311 = vmatprep.subr.mxu0 0.0
        %312 = vmatpush1.msra.mxu0 0.0
        %313 = vmatprep.subr.mxu0 0.0
        %314 = vmatpush1.msra.mxu0 0.0
        %315 = vmatprep.subr.mxu0 0.0
        %316 = vmatpush1.msra.mxu0 0.0
        %317 = vmatprep.subr.mxu0 0.0
        %318 = vmatpush1.msra.mxu0 0.0
        %319 = vmatprep.subr.mxu0 0.0
        %320 = vmatpush1.msra.mxu0 0.0
        %321 = vmatprep.subr.mxu0 0.0
        %322 = vmatpush1.msra.mxu0 0.0
        %323 = vmatprep.subr.mxu0 0.0
        %324 = vmatpush1.msra.mxu0 0.0
        %325 = vmatprep.subr.mxu0 0.0
        %326 = vmatpush1.msra.mxu0 0.0
        %327 = vmatprep.subr.mxu0 0.0
        %328 = vmatpush1.msra.mxu0 0.0
        %329 = vmatprep.subr.mxu0 0.0
        %330 = vmatpush1.msra.mxu0 0.0
        %331 = vmatprep.subr.mxu0 0.0
        %332 = vmatpush1.msra.mxu0 0.0
        %333 = vmatprep.subr.mxu0 0.0
        %334 = vmatpush1.msra.mxu0 0.0
        %335 = vmatprep.subr.mxu0 0.0
        %336 = vmatpush1.msra.mxu0 0.0
        %337 = vmatprep.subr.mxu0 0.0
        %338 = vmatpush1.msra.mxu0 0.0
        %339 = vmatprep.subr.mxu0 0.0
        %340 = vmatpush1.msra.mxu0 0.0
        %341 = vmatprep.subr.mxu0 0.0
        %342 = vmatpush1.msra.mxu0 0.0
        %343 = vmatprep.subr.mxu0 0.0
        %344 = vmatpush1.msra.mxu0 0.0
        %345 = vmatprep.subr.mxu0 0.0
        %346 = vmatpush1.msra.mxu0 0.0
        %347 = vmatprep.subr.mxu0 0.0
        %348 = vmatpush1.msra.mxu0 0.0
        %349 = vmatprep.subr.mxu0 0.0
        %350 = vmatpush1.msra.mxu0 0.0
        %351 = vmatprep.subr.mxu0 0.0
        %352 = vmatpush1.msra.mxu0 0.0
        %353 = vmatprep.subr.mxu0 0.0
        %354 = vmatpush1.msra.mxu0 0.0
        %355 = vmatprep.subr.mxu0 0.0
        %356 = vmatpush1.msra.mxu0 0.0
        %357 = vmatprep.mubr.f32.mxu0 0.0
        %358 = vmatmul.mubr.f32.gmra.mrb[0].mxu0 %v284
        %v359 = vpop.f32.mrb[0].mxu0
        %v360 = vadd.f32 0.0, %v359
        %v361 = vpop.f32.mrb[0].mxu0
        %v362 = vadd.f32 0.0, %v361
        %363 = vdwg.mxu0
        %s364 = scalar_lea.vmem %s243, 80 [#allocation2]
        %v365 = vld [vmem:[%s364] sm:$0xff]
        %v366 = vld [vmem:[%s364 + $0x8] sm:$0xff]
        %v367 = vld [vmem:[%s364 + $0x10] sm:$0xff]
        %v368 = vld [vmem:[%s364 + $0x18] sm:$0xff]
        %v369 = vld [vmem:[%s364 + $0x20] sm:$0xff]
        %v370 = vld [vmem:[%s364 + $0x28] sm:$0xff]
        %v371 = vld [vmem:[%s364 + $0x30] sm:$0xff]
        %v372 = vld [vmem:[%s364 + $0x38] sm:$0xff]
        %v373 = vld [vmem:[%s364 + $0x40] sm:$0xf]
        %v374 = vld [vmem:[%s364 + $0x48] sm:$0xf]
        %v376 = vsel %vm286, %v373, 0
        %v379 = vsel %vm286, %v374, 0
        %381 = vmatprep.subr.mxu0 %v366
        %382 = vmatpush1.msra.mxu0 %v365
        %383 = vmatprep.subr.mxu0 %v368
        %384 = vmatpush1.msra.mxu0 %v367
        %385 = vmatprep.subr.mxu0 %v370
        %386 = vmatpush1.msra.mxu0 %v369
        %387 = vmatprep.subr.mxu0 %v372
        %388 = vmatpush1.msra.mxu0 %v371
        %389 = vmatprep.subr.mxu0 %v379
        %390 = vmatpush1.msra.mxu0 %v376
        %391 = vmatprep.subr.mxu0 0.0
        %392 = vmatpush1.msra.mxu0 0.0
        %393 = vmatprep.subr.mxu0 0.0
        %394 = vmatpush1.msra.mxu0 0.0
        %395 = vmatprep.subr.mxu0 0.0
        %396 = vmatpush1.msra.mxu0 0.0
        %397 = vmatprep.subr.mxu0 0.0
        %398 = vmatpush1.msra.mxu0 0.0
        %399 = vmatprep.subr.mxu0 0.0
        %400 = vmatpush1.msra.mxu0 0.0
        %401 = vmatprep.subr.mxu0 0.0
        %402 = vmatpush1.msra.mxu0 0.0
        %403 = vmatprep.subr.mxu0 0.0
        %404 = vmatpush1.msra.mxu0 0.0
        %405 = vmatprep.subr.mxu0 0.0
        %406 = vmatpush1.msra.mxu0 0.0
        %407 = vmatprep.subr.mxu0 0.0
        %408 = vmatpush1.msra.mxu0 0.0
        %409 = vmatprep.subr.mxu0 0.0
        %410 = vmatpush1.msra.mxu0 0.0
        %411 = vmatprep.subr.mxu0 0.0
        %412 = vmatpush1.msra.mxu0 0.0
        %413 = vmatprep.subr.mxu0 0.0
        %414 = vmatpush1.msra.mxu0 0.0
        %415 = vmatprep.subr.mxu0 0.0
        %416 = vmatpush1.msra.mxu0 0.0
        %417 = vmatprep.subr.mxu0 0.0
        %418 = vmatpush1.msra.mxu0 0.0
        %419 = vmatprep.subr.mxu0 0.0
        %420 = vmatpush1.msra.mxu0 0.0
        %421 = vmatprep.subr.mxu0 0.0
        %422 = vmatpush1.msra.mxu0 0.0
        %423 = vmatprep.subr.mxu0 0.0
        %424 = vmatpush1.msra.mxu0 0.0
        %425 = vmatprep.subr.mxu0 0.0
        %426 = vmatpush1.msra.mxu0 0.0
        %427 = vmatprep.subr.mxu0 0.0
        %428 = vmatpush1.msra.mxu0 0.0
        %429 = vmatprep.subr.mxu0 0.0
        %430 = vmatpush1.msra.mxu0 0.0
        %431 = vmatprep.subr.mxu0 0.0
        %432 = vmatpush1.msra.mxu0 0.0
        %433 = vmatprep.subr.mxu0 0.0
        %434 = vmatpush1.msra.mxu0 0.0
        %435 = vmatprep.subr.mxu0 0.0
        %436 = vmatpush1.msra.mxu0 0.0
        %437 = vmatprep.subr.mxu0 0.0
        %438 = vmatpush1.msra.mxu0 0.0
        %439 = vmatprep.subr.mxu0 0.0
        %440 = vmatpush1.msra.mxu0 0.0
        %441 = vmatprep.subr.mxu0 0.0
        %442 = vmatpush1.msra.mxu0 0.0
        %443 = vmatprep.subr.mxu0 0.0
        %444 = vmatpush1.msra.mxu0 0.0
        %445 = vmatprep.mubr.f32.mxu0 0.0
        %446 = vmatmul.mubr.f32.gmra.mrb[0].mxu0 %v284
        %v447 = vpop.f32.mrb[0].mxu0
        %v448 = vadd.f32 0.0, %v447
        %v449 = vpop.f32.mrb[0].mxu0
        %v450 = vadd.f32 0.0, %v449
        %451 = vdwg.mxu0
        %v452 = vmax.f32 %v360, %v448
        %v453 = vmax.f32 %v362, %v450
        %s454 = scalar_lea.vmem %s243, 160 [#allocation2]
        %v455 = vld [vmem:[%s454] sm:$0xff]
        %v456 = vld [vmem:[%s454 + $0x8] sm:$0xff]
        %v457 = vld [vmem:[%s454 + $0x10] sm:$0xff]
        %v458 = vld [vmem:[%s454 + $0x18] sm:$0xff]
        %v459 = vld [vmem:[%s454 + $0x20] sm:$0xff]
        %v460 = vld [vmem:[%s454 + $0x28] sm:$0xff]
        %v461 = vld [vmem:[%s454 + $0x30] sm:$0xff]
        %v462 = vld [vmem:[%s454 + $0x38] sm:$0xff]
        %v463 = vld [vmem:[%s454 + $0x40] sm:$0xf]
        %v464 = vld [vmem:[%s454 + $0x48] sm:$0xf]
        %v466 = vsel %vm286, %v463, 0
        %v469 = vsel %vm286, %v464, 0
        %471 = vmatprep.subr.mxu0 %v456
        %472 = vmatpush1.msra.mxu0 %v455
        %473 = vmatprep.subr.mxu0 %v458
        %474 = vmatpush1.msra.mxu0 %v457
        %475 = vmatprep.subr.mxu0 %v460
        %476 = vmatpush1.msra.mxu0 %v459
        %477 = vmatprep.subr.mxu0 %v462
        %478 = vmatpush1.msra.mxu0 %v461
        %479 = vmatprep.subr.mxu0 %v469
        %480 = vmatpush1.msra.mxu0 %v466
        %481 = vmatprep.subr.mxu0 0.0
        %482 = vmatpush1.msra.mxu0 0.0
        %483 = vmatprep.subr.mxu0 0.0
        %484 = vmatpush1.msra.mxu0 0.0
        %485 = vmatprep.subr.mxu0 0.0
        %486 = vmatpush1.msra.mxu0 0.0
        %487 = vmatprep.subr.mxu0 0.0
        %488 = vmatpush1.msra.mxu0 0.0
        %489 = vmatprep.subr.mxu0 0.0
        %490 = vmatpush1.msra.mxu0 0.0
        %491 = vmatprep.subr.mxu0 0.0
        %492 = vmatpush1.msra.mxu0 0.0
        %493 = vmatprep.subr.mxu0 0.0
        %494 = vmatpush1.msra.mxu0 0.0
        %495 = vmatprep.subr.mxu0 0.0
        %496 = vmatpush1.msra.mxu0 0.0
        %497 = vmatprep.subr.mxu0 0.0
        %498 = vmatpush1.msra.mxu0 0.0
        %499 = vmatprep.subr.mxu0 0.0
        %500 = vmatpush1.msra.mxu0 0.0
        %501 = vmatprep.subr.mxu0 0.0
        %502 = vmatpush1.msra.mxu0 0.0
        %503 = vmatprep.subr.mxu0 0.0
        %504 = vmatpush1.msra.mxu0 0.0
        %505 = vmatprep.subr.mxu0 0.0
        %506 = vmatpush1.msra.mxu0 0.0
        %507 = vmatprep.subr.mxu0 0.0
        %508 = vmatpush1.msra.mxu0 0.0
        %509 = vmatprep.subr.mxu0 0.0
        %510 = vmatpush1.msra.mxu0 0.0
        %511 = vmatprep.subr.mxu0 0.0
        %512 = vmatpush1.msra.mxu0 0.0
        %513 = vmatprep.subr.mxu0 0.0
        %514 = vmatpush1.msra.mxu0 0.0
        %515 = vmatprep.subr.mxu0 0.0
        %516 = vmatpush1.msra.mxu0 0.0
        %517 = vmatprep.subr.mxu0 0.0
        %518 = vmatpush1.msra.mxu0 0.0
        %519 = vmatprep.subr.mxu0 0.0
        %520 = vmatpush1.msra.mxu0 0.0
        %521 = vmatprep.subr.mxu0 0.0
        %522 = vmatpush1.msra.mxu0 0.0
        %523 = vmatprep.subr.mxu0 0.0
        %524 = vmatpush1.msra.mxu0 0.0
        %525 = vmatprep.subr.mxu0 0.0
        %526 = vmatpush1.msra.mxu0 0.0
        %527 = vmatprep.subr.mxu0 0.0
        %528 = vmatpush1.msra.mxu0 0.0
        %529 = vmatprep.subr.mxu0 0.0
        %530 = vmatpush1.msra.mxu0 0.0
        %531 = vmatprep.subr.mxu0 0.0
        %532 = vmatpush1.msra.mxu0 0.0
        %533 = vmatprep.subr.mxu0 0.0
        %534 = vmatpush1.msra.mxu0 0.0
        %535 = vmatprep.mubr.f32.mxu0 0.0
        %536 = vmatmul.mubr.f32.gmra.mrb[0].mxu0 %v284
        %v537 = vpop.f32.mrb[0].mxu0
        %v538 = vadd.f32 0.0, %v537
        %v539 = vpop.f32.mrb[0].mxu0
        %v540 = vadd.f32 0.0, %v539
        %541 = vdwg.mxu0
        %v542 = vmax.f32 %v452, %v538
        %v543 = vmax.f32 %v453, %v540
        %s544 = scalar_lea.vmem %s243, 240 [#allocation2]
        %v545 = vld [vmem:[%s544] sm:$0xff]
        %v546 = vld [vmem:[%s544 + $0x8] sm:$0xff]
        %v547 = vld [vmem:[%s544 + $0x10] sm:$0xff]
        %v548 = vld [vmem:[%s544 + $0x18] sm:$0xff]
        %v549 = vld [vmem:[%s544 + $0x20] sm:$0xff]
        %v550 = vld [vmem:[%s544 + $0x28] sm:$0xff]
        %v551 = vld [vmem:[%s544 + $0x30] sm:$0xff]
        %v552 = vld [vmem:[%s544 + $0x38] sm:$0xff]
        %v553 = vld [vmem:[%s544 + $0x40] sm:$0xf]
        %v554 = vld [vmem:[%s544 + $0x48] sm:$0xf]
        %v556 = vsel %vm286, %v553, 0
        %v559 = vsel %vm286, %v554, 0
        %561 = vmatprep.subr.mxu0 %v546
        %562 = vmatpush1.msra.mxu0 %v545
        %563 = vmatprep.subr.mxu0 %v548
        %564 = vmatpush1.msra.mxu0 %v547
        %565 = vmatprep.subr.mxu0 %v550
        %566 = vmatpush1.msra.mxu0 %v549
        %567 = vmatprep.subr.mxu0 %v552
        %568 = vmatpush1.msra.mxu0 %v551
        %569 = vmatprep.subr.mxu0 %v559
        %570 = vmatpush1.msra.mxu0 %v556
        %571 = vmatprep.subr.mxu0 0.0
        %572 = vmatpush1.msra.mxu0 0.0
        %573 = vmatprep.subr.mxu0 0.0
        %574 = vmatpush1.msra.mxu0 0.0
        %575 = vmatprep.subr.mxu0 0.0
        %576 = vmatpush1.msra.mxu0 0.0
        %577 = vmatprep.subr.mxu0 0.0
        %578 = vmatpush1.msra.mxu0 0.0
        %579 = vmatprep.subr.mxu0 0.0
        %580 = vmatpush1.msra.mxu0 0.0
        %581 = vmatprep.subr.mxu0 0.0
        %582 = vmatpush1.msra.mxu0 0.0
        %583 = vmatprep.subr.mxu0 0.0
        %584 = vmatpush1.msra.mxu0 0.0
        %585 = vmatprep.subr.mxu0 0.0
        %586 = vmatpush1.msra.mxu0 0.0
        %587 = vmatprep.subr.mxu0 0.0
        %588 = vmatpush1.msra.mxu0 0.0
        %589 = vmatprep.subr.mxu0 0.0
        %590 = vmatpush1.msra.mxu0 0.0
        %591 = vmatprep.subr.mxu0 0.0
        %592 = vmatpush1.msra.mxu0 0.0
        %593 = vmatprep.subr.mxu0 0.0
        %594 = vmatpush1.msra.mxu0 0.0
        %595 = vmatprep.subr.mxu0 0.0
        %596 = vmatpush1.msra.mxu0 0.0
        %597 = vmatprep.subr.mxu0 0.0
        %598 = vmatpush1.msra.mxu0 0.0
        %599 = vmatprep.subr.mxu0 0.0
        %600 = vmatpush1.msra.mxu0 0.0
        %601 = vmatprep.subr.mxu0 0.0
        %602 = vmatpush1.msra.mxu0 0.0
        %603 = vmatprep.subr.mxu0 0.0
        %604 = vmatpush1.msra.mxu0 0.0
        %605 = vmatprep.subr.mxu0 0.0
        %606 = vmatpush1.msra.mxu0 0.0
        %607 = vmatprep.subr.mxu0 0.0
        %608 = vmatpush1.msra.mxu0 0.0
        %609 = vmatprep.subr.mxu0 0.0
        %610 = vmatpush1.msra.mxu0 0.0
        %611 = vmatprep.subr.mxu0 0.0
        %612 = vmatpush1.msra.mxu0 0.0
        %613 = vmatprep.subr.mxu0 0.0
        %614 = vmatpush1.msra.mxu0 0.0
        %615 = vmatprep.subr.mxu0 0.0
        %616 = vmatpush1.msra.mxu0 0.0
        %617 = vmatprep.subr.mxu0 0.0
        %618 = vmatpush1.msra.mxu0 0.0
        %619 = vmatprep.subr.mxu0 0.0
        %620 = vmatpush1.msra.mxu0 0.0
        %621 = vmatprep.subr.mxu0 0.0
        %622 = vmatpush1.msra.mxu0 0.0
        %623 = vmatprep.subr.mxu0 0.0
        %624 = vmatpush1.msra.mxu0 0.0
        %625 = vmatprep.mubr.f32.mxu0 0.0
        %626 = vmatmul.mubr.f32.gmra.mrb[0].mxu0 %v284
        %v627 = vpop.f32.mrb[0].mxu0
        %v628 = vadd.f32 0.0, %v627
        %v629 = vpop.f32.mrb[0].mxu0
        %v630 = vadd.f32 0.0, %v629
        %631 = vdwg.mxu0
        %v632 = vmax.f32 %v542, %v628
        %v633 = vmax.f32 %v543, %v630
        %v634 = vld [vmem:[%s2] sm:$0xff]
        %636 = vset.pattern.permute.xlu0 0
        %637 = vperm.xlu0 %636, %v634
        %v638 = vpop.permute.xlu0 %637
        %v640 = vadd.f32 %v632, %v638
        %v641 = vadd.f32 %v633, %v638
        %v642 = vmax.f32 %v640, 0.0
        %v643 = vmax.f32 %v641, 0.0
        %644 = vst [vmem:[%s269] sm:$0xff] %v642
        %645 = vst [vmem:[%s269 + $0x8] sm:$0xff] %v643
        %s646 = smul.u32 2, %s14
        %p647 = scmp.lt.s32.totalorder %s646, 3
        %s648 = scalar_select %p647, %s646, 3
        %s649 = smul.addr %s648, 8
        %s650 = scalar_lea.vmem %s3, %s649
        // Predicated region
        $region56: #{conv3d_block_forward.1} parent=50 // pred_check
          %p651 = pneg %p100
        $region57: #{conv3d_block_forward.1} parent=50 // pred_check_branch
          %653 = sbr.rel (%p651) target = $region59
        $region58: #{conv3d_block_forward.1} parent=50 // pred_region
          %s654 = smul.u32 2, %s14
        $region59: #{conv3d_block_forward.1} parent=50 // pred_fallthru
          _
      $region51: #{conv3d_block_forward.1} parent=5 // pred_fallthru
        _
      %p655 = scmp.le.s32.totalorder 2, %s9
      // Predicated region
      $region60: #{conv3d_block_forward.1} parent=5 // pred_check
        %p656 = pneg %p655
      $region61: #{conv3d_block_forward.1} parent=5 // pred_check_branch
        %658 = sbr.rel (%p656) target = $region63
      $region62: #{conv3d_block_forward.1} parent=5 // pred_region
        %s659 = ssub.s32 %s9, 2
        // Predicated region
        $region64: #{conv3d_block_forward.1} parent=62 // pred_check
          %p660 = pneg %p106
        $region65: #{conv3d_block_forward.1} parent=62 // pred_check_branch
          %662 = sbr.rel (%p660) target = $region67
        $region66: #{conv3d_block_forward.1} parent=62 // pred_region
          %s663 = smul.u32 2, %s15
          %p664 = scmp.lt.s32.totalorder %s663, 3
          %s665 = scalar_select %p664, %s663, 3
          %s666 = smul.addr %s665, 8
          %s667 = scalar_lea.vmem %s3, %s666
        $region67: #{conv3d_block_forward.1} parent=62 // pred_fallthru
          _
      $region63: #{conv3d_block_forward.1} parent=5 // pred_fallthru
        _
    $region6: #{conv3d_block_forward.1} parent=1 // loop_footer
      %s13 = sadd.s32 1, %s9
    $region7: #{conv3d_block_forward.1} parent=1 // loop_footer_branch
      %8 = sbr.rel target = $region3
    $region8: #{conv3d_block_forward.1} parent=1 // loop_exit
      _

</llo_original>
